<compile_context>
chip_gen: v7x
topology: tpu7x:2x2x1
jax: 0.10.0
libtpu: 0.0.40
codegen_flags: <defaults>
</compile_context>

<pallas_src>
import jax
import jax.numpy as jnp
from jax.experimental import pallas as pl
from jax.experimental.pallas import tpu as pltpu


def _round_up(n, m):
    return ((n + m - 1) // m) * m


# ---- packed-parameter slab layout (all static column offsets) --------------
#   cols  0:4   W1 [8, 4]   (PyTorch [out, in])
#   cols  4:12  W2 [8, 8]
#   cols 12:20  W3 [2, 8]   (rows 0:2)
#   col  20     b1 [8]
#   col  21     b2 [8]
#   col  22     b3 [2]      (rows 0:2)
_SLAB_SHAPE = (8, 128)


def pack_params(params):
    slab = jnp.zeros(_SLAB_SHAPE, jnp.float32)
    slab = slab.at[:, 0:4].set(params["w1"])
    slab = slab.at[:, 4:12].set(params["w2"])
    slab = slab.at[0:2, 12:20].set(params["w3"])
    slab = slab.at[:, 20].set(params["b1"])
    slab = slab.at[:, 21].set(params["b2"])
    slab = slab.at[0:2, 22].set(params["b3"])
    return slab


def _mlp_kernel(x_ref, p_ref, o_ref):
    # x_ref: [4, Bt] (batch on lanes), p_ref: [8, 128] slab, o_ref: [2, Bt]
    x = x_ref[...]
    p = p_ref[...]

    w1 = p[:, 0:4]          # [8, 4]
    w2 = p[:, 4:12]         # [8, 8]
    w3 = p[0:2, 12:20]      # [2, 8]
    b1 = p[:, 20:21]        # [8, 1] -> broadcast over lanes
    b2 = p[:, 21:22]        # [8, 1]
    b3 = p[0:2, 22:23]      # [2, 1]

    h = jnp.dot(w1, x, preferred_element_type=jnp.float32) + b1
    h = jnp.maximum(h, 0.0)
    h = jnp.dot(w2, h, preferred_element_type=jnp.float32) + b2
    h = jnp.maximum(h, 0.0)
    y = jnp.dot(w3, h, preferred_element_type=jnp.float32) + b3
    o_ref[...] = y.astype(o_ref.dtype)


def mlp_forward(x, params, *, b_tile=32768):
    """Forward pass. x: [B, 4] f32, params in PyTorch [out, in] layout.

    Returns [B, 2] f32, identical semantics to NeuralNetwork.forward.
    """
    B, F = x.shape
    assert F == 4, F

    # Lane-dense batch tile: multiple of 128, clamped for small batches.
    b_tile = min(b_tile, _round_up(B, 128))
    B_pad = _round_up(B, b_tile)

    # Transpose to [features, batch] and zero-pad batch up to the tile grid.
    x_t = jnp.zeros((4, B_pad), jnp.float32).at[:, :B].set(x.T)
    slab = pack_params(params)

    grid = (B_pad // b_tile,)
    out_t = pl.pallas_call(
        _mlp_kernel,
        out_shape=jax.ShapeDtypeStruct((2, B_pad), jnp.float32),
        grid_spec=pltpu.PrefetchScalarGridSpec(
            num_scalar_prefetch=0,
            grid=grid,
            in_specs=[
                # batch-tiled activations: block index walks the lane axis
                pl.BlockSpec((4, b_tile), lambda i: (0, i)),
                # parameter slab: constant index map -> stays VMEM-resident
                pl.BlockSpec(_SLAB_SHAPE, lambda i: (0, 0)),
            ],
            out_specs=pl.BlockSpec((2, b_tile), lambda i: (0, i)),
        ),
        compiler_params=pltpu.CompilerParams(
            dimension_semantics=("parallel",),
        ),
    )(x_t, slab)

    return out_t[:, :B].T


def init_params(key):
    """Mimics NeuralNetwork.initialise_weights: kaiming_uniform_ (relu gain)
    on weights, zeros on biases. Weights kept in PyTorch [out, in] layout."""
    def kaiming_uniform(key, fan_out, fan_in):
        bound = jnp.sqrt(2.0) * jnp.sqrt(3.0 / fan_in)
        return jax.random.uniform(
            key, (fan_out, fan_in), jnp.float32, minval=-bound, maxval=bound
        )

    k1, k2, k3 = jax.random.split(key, 3)
    return {
        "w1": kaiming_uniform(k1, 8, 4),
        "b1": jnp.zeros((8,), jnp.float32),
        "w2": kaiming_uniform(k2, 8, 8),
        "b2": jnp.zeros((8,), jnp.float32),
        "w3": kaiming_uniform(k3, 2, 8),
        "b3": jnp.zeros((2,), jnp.float32),
    }


def reference_forward(x, params):
    h = jnp.maximum(x @ params["w1"].T + params["b1"], 0.0)
    h = jnp.maximum(h @ params["w2"].T + params["b2"], 0.0)
    return h @ params["w3"].T + params["b3"]


if __name__ == "__main__":
    key = jax.random.PRNGKey(0)
    kx, kp = jax.random.split(key)

    B = 8  # small example batch (module spec: input features = 4)
    x = jax.random.normal(kx, (B, 4), jnp.float32)
    params = init_params(kp)

    out = jax.block_until_ready(mlp_forward(x, params))
    ref = reference_forward(x, params)

    assert out.shape == (B, 2), out.shape
    assert jnp.allclose(out, ref, atol=1e-5, rtol=1e-5), "mismatch vs reference"

    # Also sanity-check a batch large enough to exercise multiple grid tiles.
    B2 = 1000
    x2 = jax.random.normal(kx, (B2, 4), jnp.float32)
    out2 = jax.block_until_ready(mlp_forward(x2, params, b_tile=256))
    ref2 = reference_forward(x2, params)
    assert out2.shape == (B2, 2), out2.shape
    assert jnp.allclose(out2, ref2, atol=1e-5, rtol=1e-5), "tiled mismatch"

    print("KERNEL_OK")
</pallas_src>

<mosaic_0001>
module attributes {stable_mosaic.version = 11 : i64} {
  func.func @_mlp_kernel(%arg0: i32, %arg1: memref<4x128xf32, #tpu.memory_space<vmem>>, %arg2: memref<8x128xf32, #tpu.memory_space<vmem>>, %arg3: memref<2x128xf32, #tpu.memory_space<vmem>>) attributes {dimension_semantics = [#tpu.dimension_semantics<parallel>], iteration_bounds = array<i64: 1>, scalar_prefetch = 0 : i64, scratch_operands = 0 : i64, tpu.core_type = #tpu.core_type<tc>, window_params = [{transform_indices = @transform_0, window_bounds = array<i64: 4, 128>}, {pipeline_mode = #tpu.pipeline_mode<synchronous>, transform_indices = @transform_1, window_bounds = array<i64: 8, 128>}, {transform_indices = @transform_2, window_bounds = array<i64: 2, 128>}]} {
    %c0 = arith.constant 0 : index
    %c0_0 = arith.constant 0 : index
    %0 = vector.load %arg1[%c0, %c0_0] : memref<4x128xf32, #tpu.memory_space<vmem>>, vector<4x128xf32>
    %c0_1 = arith.constant 0 : index
    %c0_2 = arith.constant 0 : index
    %1 = vector.load %arg2[%c0_1, %c0_2] : memref<8x128xf32, #tpu.memory_space<vmem>>, vector<8x128xf32>
    %2 = vector.extract_strided_slice %1 {offsets = [0, 0], sizes = [8, 4], strides = [1, 1]} : vector<8x128xf32> to vector<8x4xf32>
    %3 = vector.extract_strided_slice %1 {offsets = [0, 4], sizes = [8, 8], strides = [1, 1]} : vector<8x128xf32> to vector<8x8xf32>
    %4 = vector.extract_strided_slice %1 {offsets = [0, 12], sizes = [2, 8], strides = [1, 1]} : vector<8x128xf32> to vector<2x8xf32>
    %5 = vector.extract_strided_slice %1 {offsets = [0, 20], sizes = [8, 1], strides = [1, 1]} : vector<8x128xf32> to vector<8x1xf32>
    %6 = vector.extract_strided_slice %1 {offsets = [0, 21], sizes = [8, 1], strides = [1, 1]} : vector<8x128xf32> to vector<8x1xf32>
    %7 = vector.extract_strided_slice %1 {offsets = [0, 22], sizes = [2, 1], strides = [1, 1]} : vector<8x128xf32> to vector<2x1xf32>
    %cst = arith.constant dense<0.000000e+00> : vector<8x128xf32>
    %8 = tpu.matmul %2, %0, %cst {dimension_numbers = #tpu.dot_dimension_numbers<[1], [0], [0], [1], [0, 0, 1, 1], [], []>} : vector<8x4xf32>, vector<4x128xf32>, vector<8x128xf32> -> vector<8x128xf32>
    %9 = vector.broadcast %5 : vector<8x1xf32> to vector<8x128xf32>
    %10 = arith.addf %8, %9 : vector<8x128xf32>
    %cst_3 = arith.constant 0.000000e+00 : f32
    %11 = vector.broadcast %cst_3 : f32 to vector<8x128xf32>
    %12 = arith.maximumf %10, %11 : vector<8x128xf32>
    %cst_4 = arith.constant dense<0.000000e+00> : vector<8x128xf32>
    %13 = tpu.matmul %3, %12, %cst_4 {dimension_numbers = #tpu.dot_dimension_numbers<[1], [0], [0], [1], [0, 0, 1, 1], [], []>} : vector<8x8xf32>, vector<8x128xf32>, vector<8x128xf32> -> vector<8x128xf32>
    %14 = vector.broadcast %6 : vector<8x1xf32> to vector<8x128xf32>
    %15 = arith.addf %13, %14 : vector<8x128xf32>
    %cst_5 = arith.constant 0.000000e+00 : f32
    %16 = vector.broadcast %cst_5 : f32 to vector<8x128xf32>
    %17 = arith.maximumf %15, %16 : vector<8x128xf32>
    %cst_6 = arith.constant dense<0.000000e+00> : vector<2x128xf32>
    %18 = tpu.matmul %4, %17, %cst_6 {dimension_numbers = #tpu.dot_dimension_numbers<[1], [0], [0], [1], [0, 0, 1, 1], [], []>} : vector<2x8xf32>, vector<8x128xf32>, vector<2x128xf32> -> vector<2x128xf32>
    %19 = vector.broadcast %7 : vector<2x1xf32> to vector<2x128xf32>
    %20 = arith.addf %18, %19 : vector<2x128xf32>
    %c0_7 = arith.constant 0 : index
    %c0_8 = arith.constant 0 : index
    %21 = vector.load %arg3[%c0_7, %c0_8] : memref<2x128xf32, #tpu.memory_space<vmem>>, vector<2x128xf32>
    tpu.vector_store %arg3[%c0_7, %c0_8], %20 {strides = array<i32>} : memref<2x128xf32, #tpu.memory_space<vmem>>, vector<2x128xf32>,
    return
  }
  func.func @transform_0(%arg0: i32) -> (i32, i32) {
    %c0_i32 = arith.constant 0 : i32
    %c0_i32_0 = arith.constant 0 : i32
    return %c0_i32, %arg0 : i32, i32
  }
  func.func @transform_1(%arg0: i32) -> (i32, i32) {
    %c0_i32 = arith.constant 0 : i32
    %c0_i32_0 = arith.constant 0 : i32
    %c0_i32_1 = arith.constant 0 : i32
    return %c0_i32, %c0_i32_0 : i32, i32
  }
  func.func @transform_2(%arg0: i32) -> (i32, i32) {
    %c0_i32 = arith.constant 0 : i32
    %c0_i32_0 = arith.constant 0 : i32
    return %c0_i32, %arg0 : i32, i32
  }
}

</mosaic_0001>

<llo_original>
// kernel: tpu_custom_call.1
$region0: #{tpu_custom_call.1}
  #allocation0 [shape = 'u32[]', space=smem, size = 0x4, offset = 0x4, fixed_abs, tag = 'smem constant byte address 0x4 - core index']
  #allocation1 [shape = 'u32[144,128]{1,0:T(1,128)}', space=vmem, size = 0x12000, scoped, tag = 'internal scratch']
  %s0 = inlined_call_operand.hbm [shape: f32[4,128], index: 0, kind: input, shape index: {}]
  %s1 = inlined_call_operand.hbm [shape: f32[8,128], index: 1, kind: input, shape index: {}]
  %s2 = inlined_call_operand.hbm [shape: f32[2,128], index: 2, kind: output, shape index: {}]
  %s3 = sld [smem:[#allocation0]]
  $region26: #{tpu_custom_call.1} parent=0
    _
  %s5 = ssub.s32 1, %s3
  %s6 = scalar_select 0, %s5, %s3
  $region1: #{tpu_custom_call.1} parent=0
    #allocation2 [shape = 'u8[2048]{0}', space=vmem, size = 0x800, scoped, tag = 'input window, operand 0, single buffered']
    #allocation3 [shape = 's32[1]{0}', space=sflag, size = 0x4, scoped, tag = 'scoped memory for tpu_custom_call.1']
    #allocation4 [shape = 's32[1]{0}', space=sflag, size = 0x4, scoped, tag = 'scoped memory for tpu_custom_call.1']
    #allocation5 [shape = 'u8[4096]{0}', space=vmem, size = 0x1000, scoped, tag = 'input window, operand 1, single buffered']
    #allocation6 [shape = 's32[1]{0}', space=sflag, size = 0x4, scoped, tag = 'scoped memory for tpu_custom_call.1']
    #allocation7 [shape = 'u8[1024]{0}', space=vmem, size = 0x400, scoped, tag = 'output window, operand 0, single buffered']
    %7 = vsyncpa [#allocation3], 0
    %8 = vsyncpa [#allocation6], 0
    %9 = vsyncpa [#allocation4], 0
    // Predicated region
    $region2: #{tpu_custom_call.1} parent=1 // pred_check
      _
    $region3: #{tpu_custom_call.1} parent=1 // pred_check_branch
      %11 = sbr.rel (0) target = $region5
    $region4: #{tpu_custom_call.1} parent=1 // pred_region
      %s13 = ssub.s32 64, 64
      %14 = vsyncadd [#allocation3], %s13
      %s16 = sshll.u32 [#allocation2], 4
      %s17 = int_to_ptr.vmem [resolvable:$true] %s16
      %19 = dma.hbm_to_vmem [thread:$0]  %s0, 64, %s17, [#allocation3]
    $region5: #{tpu_custom_call.1} parent=1 // pred_fallthru
      _
    // Predicated region
    $region6: #{tpu_custom_call.1} parent=1 // pred_check
      _
    $region7: #{tpu_custom_call.1} parent=1 // pred_check_branch
      %21 = sbr.rel (0) target = $region9
    $region8: #{tpu_custom_call.1} parent=1 // pred_region
      %s23 = ssub.s32 128, 128
      %24 = vsyncadd [#allocation6], %s23
      %s26 = sshll.u32 [#allocation5], 4
      %s27 = int_to_ptr.vmem [resolvable:$true] %s26
      %29 = dma.hbm_to_vmem [thread:$0]  %s1, 128, %s27, [#allocation6]
    $region9: #{tpu_custom_call.1} parent=1 // pred_fallthru
      _
    // Predicated region
    $region10: #{tpu_custom_call.1} parent=1 // pred_check
      _
    $region11: #{tpu_custom_call.1} parent=1 // pred_check_branch
      %31 = sbr.rel (0) target = $region13
    $region12: #{tpu_custom_call.1} parent=1 // pred_region
      %32 = dma.done [#allocation3], 64
    $region13: #{tpu_custom_call.1} parent=1 // pred_fallthru
      _
    // Predicated region
    $region14: #{tpu_custom_call.1} parent=1 // pred_check
      _
    $region15: #{tpu_custom_call.1} parent=1 // pred_check_branch
      %34 = sbr.rel (0) target = $region17
    $region16: #{tpu_custom_call.1} parent=1 // pred_region
      %35 = dma.done [#allocation6], 128
    $region17: #{tpu_custom_call.1} parent=1 // pred_fallthru
      _
    %v36 = vld [vmem:[#allocation2] sm:$0xf]
    %v37 = vld [vmem:[#allocation5] sm:$0xff]
    %39 = vset.pattern.permute.xlu0 20
    %40 = vperm.xlu0 %39, %v37
    %v41 = vpop.permute.xlu0 %40
    %vm43 = vcmask 31744
    %v44 = vsel %vm43, %v37, 0
    %vm46 = vcmask 1043456
    %v48 = vsel %vm46, %v36, 0
    %50 = vmatprep.subr.mxu0 0.0
    %51 = vmatpush1.msra.mxu0 %v48
    %52 = vmatprep.subr.mxu0 0.0
    %53 = vmatpush1.msra.mxu0 0.0
    %54 = vmatprep.subr.mxu0 0.0
    %55 = vmatpush1.msra.mxu0 0.0
    %56 = vmatprep.subr.mxu0 0.0
    %57 = vmatpush1.msra.mxu0 0.0
    %58 = vmatprep.subr.mxu0 0.0
    %59 = vmatpush1.msra.mxu0 0.0
    %60 = vmatprep.subr.mxu0 0.0
    %61 = vmatpush1.msra.mxu0 0.0
    %62 = vmatprep.subr.mxu0 0.0
    %63 = vmatpush1.msra.mxu0 0.0
    %64 = vmatprep.subr.mxu0 0.0
    %65 = vmatpush1.msra.mxu0 0.0
    %66 = vmatprep.subr.mxu0 0.0
    %67 = vmatpush1.msra.mxu0 0.0
    %68 = vmatprep.subr.mxu0 0.0
    %69 = vmatpush1.msra.mxu0 0.0
    %70 = vmatprep.subr.mxu0 0.0
    %71 = vmatpush1.msra.mxu0 0.0
    %72 = vmatprep.subr.mxu0 0.0
    %73 = vmatpush1.msra.mxu0 0.0
    %74 = vmatprep.subr.mxu0 0.0
    %75 = vmatpush1.msra.mxu0 0.0
    %76 = vmatprep.subr.mxu0 0.0
    %77 = vmatpush1.msra.mxu0 0.0
    %78 = vmatprep.subr.mxu0 0.0
    %79 = vmatpush1.msra.mxu0 0.0
    %80 = vmatprep.subr.mxu0 0.0
    %81 = vmatpush1.msra.mxu0 0.0
    %82 = vmatprep.subr.mxu0 0.0
    %83 = vmatpush1.msra.mxu0 0.0
    %84 = vmatprep.subr.mxu0 0.0
    %85 = vmatpush1.msra.mxu0 0.0
    %86 = vmatprep.subr.mxu0 0.0
    %87 = vmatpush1.msra.mxu0 0.0
    %88 = vmatprep.subr.mxu0 0.0
    %89 = vmatpush1.msra.mxu0 0.0
    %90 = vmatprep.subr.mxu0 0.0
    %91 = vmatpush1.msra.mxu0 0.0
    %92 = vmatprep.subr.mxu0 0.0
    %93 = vmatpush1.msra.mxu0 0.0
    %94 = vmatprep.subr.mxu0 0.0
    %95 = vmatpush1.msra.mxu0 0.0
    %96 = vmatprep.subr.mxu0 0.0
    %97 = vmatpush1.msra.mxu0 0.0
    %98 = vmatprep.subr.mxu0 0.0
    %99 = vmatpush1.msra.mxu0 0.0
    %100 = vmatprep.subr.mxu0 0.0
    %101 = vmatpush1.msra.mxu0 0.0
    %102 = vmatprep.subr.mxu0 0.0
    %103 = vmatpush1.msra.mxu0 0.0
    %104 = vmatprep.subr.mxu0 0.0
    %105 = vmatpush1.msra.mxu0 0.0
    %106 = vmatprep.subr.mxu0 0.0
    %107 = vmatpush1.msra.mxu0 0.0
    %108 = vmatprep.subr.mxu0 0.0
    %109 = vmatpush1.msra.mxu0 0.0
    %110 = vmatprep.subr.mxu0 0.0
    %111 = vmatpush1.msra.mxu0 0.0
    %112 = vmatprep.subr.mxu0 0.0
    %113 = vmatpush1.msra.mxu0 0.0
    %114 = vmatprep.mubr.f32.mxu0 0.0
    %115 = vmatmul.mubr.f32.gmra.mrb[0].mxu0 %v44
    %v116 = vpop.f32.mrb[0].mxu0
    %v117 = vadd.f32 %v41, %v116
    %v118 = vpop.f32.mrb[0].mxu0
    %119 = vdwg.mxu0
    %v120 = vmax.f32 %v117, 0.0
    %121 = vset.pattern.permute.xlu0 21
    %122 = vperm.xlu0 %121, %v37
    %v123 = vpop.permute.xlu0 %122
    %125 = vrot.lane.b32.xlu0 %v37, 124
    %v126 = vpop.permute.xlu0 %125
    %vm127 = vcmask 64512
    %v128 = vsel %vm127, %v126, 0
    %130 = vmatprep.subr.mxu0 0.0
    %131 = vmatpush1.msra.mxu0 %v120
    %132 = vmatprep.subr.mxu0 0.0
    %133 = vmatpush1.msra.mxu0 0.0
    %134 = vmatprep.subr.mxu0 0.0
    %135 = vmatpush1.msra.mxu0 0.0
    %136 = vmatprep.subr.mxu0 0.0
    %137 = vmatpush1.msra.mxu0 0.0
    %138 = vmatprep.subr.mxu0 0.0
    %139 = vmatpush1.msra.mxu0 0.0
    %140 = vmatprep.subr.mxu0 0.0
    %141 = vmatpush1.msra.mxu0 0.0
    %142 = vmatprep.subr.mxu0 0.0
    %143 = vmatpush1.msra.mxu0 0.0
    %144 = vmatprep.subr.mxu0 0.0
    %145 = vmatpush1.msra.mxu0 0.0
    %146 = vmatprep.subr.mxu0 0.0
    %147 = vmatpush1.msra.mxu0 0.0
    %148 = vmatprep.subr.mxu0 0.0
    %149 = vmatpush1.msra.mxu0 0.0
    %150 = vmatprep.subr.mxu0 0.0
    %151 = vmatpush1.msra.mxu0 0.0
    %152 = vmatprep.subr.mxu0 0.0
    %153 = vmatpush1.msra.mxu0 0.0
    %154 = vmatprep.subr.mxu0 0.0
    %155 = vmatpush1.msra.mxu0 0.0
    %156 = vmatprep.subr.mxu0 0.0
    %157 = vmatpush1.msra.mxu0 0.0
    %158 = vmatprep.subr.mxu0 0.0
    %159 = vmatpush1.msra.mxu0 0.0
    %160 = vmatprep.subr.mxu0 0.0
    %161 = vmatpush1.msra.mxu0 0.0
    %162 = vmatprep.subr.mxu0 0.0
    %163 = vmatpush1.msra.mxu0 0.0
    %164 = vmatprep.subr.mxu0 0.0
    %165 = vmatpush1.msra.mxu0 0.0
    %166 = vmatprep.subr.mxu0 0.0
    %167 = vmatpush1.msra.mxu0 0.0
    %168 = vmatprep.subr.mxu0 0.0
    %169 = vmatpush1.msra.mxu0 0.0
    %170 = vmatprep.subr.mxu0 0.0
    %171 = vmatpush1.msra.mxu0 0.0
    %172 = vmatprep.subr.mxu0 0.0
    %173 = vmatpush1.msra.mxu0 0.0
    %174 = vmatprep.subr.mxu0 0.0
    %175 = vmatpush1.msra.mxu0 0.0
    %176 = vmatprep.subr.mxu0 0.0
    %177 = vmatpush1.msra.mxu0 0.0
    %178 = vmatprep.subr.mxu0 0.0
    %179 = vmatpush1.msra.mxu0 0.0
    %180 = vmatprep.subr.mxu0 0.0
    %181 = vmatpush1.msra.mxu0 0.0
    %182 = vmatprep.subr.mxu0 0.0
    %183 = vmatpush1.msra.mxu0 0.0
    %184 = vmatprep.subr.mxu0 0.0
    %185 = vmatpush1.msra.mxu0 0.0
    %186 = vmatprep.subr.mxu0 0.0
    %187 = vmatpush1.msra.mxu0 0.0
    %188 = vmatprep.subr.mxu0 0.0
    %189 = vmatpush1.msra.mxu0 0.0
    %190 = vmatprep.subr.mxu0 0.0
    %191 = vmatpush1.msra.mxu0 0.0
    %192 = vmatprep.subr.mxu0 0.0
    %193 = vmatpush1.msra.mxu0 0.0
    %194 = vmatprep.mubr.f32.mxu0 0.0
    %195 = vmatmul.mubr.f32.gmra.mrb[0].mxu0 %v128
    %v196 = vpop.f32.mrb[0].mxu0
    %v197 = vadd.f32 %v123, %v196
    %v198 = vpop.f32.mrb[0].mxu0
    %199 = vdwg.mxu0
    %v200 = vmax.f32 %v197, 0.0
    %201 = vset.pattern.permute.xlu0 22
    %202 = vperm.xlu0 %201, %v37
    %v203 = vpop.permute.xlu0 %202
    %205 = vrot.lane.b32.xlu0 %v37, 116
    %v206 = vpop.permute.xlu0 %205
    %v207 = vsel %vm127, %v206, 0
    %209 = vmatprep.subr.mxu0 0.0
    %210 = vmatpush1.msra.mxu0 %v200
    %211 = vmatprep.subr.mxu0 0.0
    %212 = vmatpush1.msra.mxu0 0.0
    %213 = vmatprep.subr.mxu0 0.0
    %214 = vmatpush1.msra.mxu0 0.0
    %215 = vmatprep.subr.mxu0 0.0
    %216 = vmatpush1.msra.mxu0 0.0
    %217 = vmatprep.subr.mxu0 0.0
    %218 = vmatpush1.msra.mxu0 0.0
    %219 = vmatprep.subr.mxu0 0.0
    %220 = vmatpush1.msra.mxu0 0.0
    %221 = vmatprep.subr.mxu0 0.0
    %222 = vmatpush1.msra.mxu0 0.0
    %223 = vmatprep.subr.mxu0 0.0
    %224 = vmatpush1.msra.mxu0 0.0
    %225 = vmatprep.subr.mxu0 0.0
    %226 = vmatpush1.msra.mxu0 0.0
    %227 = vmatprep.subr.mxu0 0.0
    %228 = vmatpush1.msra.mxu0 0.0
    %229 = vmatprep.subr.mxu0 0.0
    %230 = vmatpush1.msra.mxu0 0.0
    %231 = vmatprep.subr.mxu0 0.0
    %232 = vmatpush1.msra.mxu0 0.0
    %233 = vmatprep.subr.mxu0 0.0
    %234 = vmatpush1.msra.mxu0 0.0
    %235 = vmatprep.subr.mxu0 0.0
    %236 = vmatpush1.msra.mxu0 0.0
    %237 = vmatprep.subr.mxu0 0.0
    %238 = vmatpush1.msra.mxu0 0.0
    %239 = vmatprep.subr.mxu0 0.0
    %240 = vmatpush1.msra.mxu0 0.0
    %241 = vmatprep.subr.mxu0 0.0
    %242 = vmatpush1.msra.mxu0 0.0
    %243 = vmatprep.subr.mxu0 0.0
    %244 = vmatpush1.msra.mxu0 0.0
    %245 = vmatprep.subr.mxu0 0.0
    %246 = vmatpush1.msra.mxu0 0.0
    %247 = vmatprep.subr.mxu0 0.0
    %248 = vmatpush1.msra.mxu0 0.0
    %249 = vmatprep.subr.mxu0 0.0
    %250 = vmatpush1.msra.mxu0 0.0
    %251 = vmatprep.subr.mxu0 0.0
    %252 = vmatpush1.msra.mxu0 0.0
    %253 = vmatprep.subr.mxu0 0.0
    %254 = vmatpush1.msra.mxu0 0.0
    %255 = vmatprep.subr.mxu0 0.0
    %256 = vmatpush1.msra.mxu0 0.0
    %257 = vmatprep.subr.mxu0 0.0
    %258 = vmatpush1.msra.mxu0 0.0
    %259 = vmatprep.subr.mxu0 0.0
    %260 = vmatpush1.msra.mxu0 0.0
    %261 = vmatprep.subr.mxu0 0.0
    %262 = vmatpush1.msra.mxu0 0.0
    %263 = vmatprep.subr.mxu0 0.0
    %264 = vmatpush1.msra.mxu0 0.0
    %265 = vmatprep.subr.mxu0 0.0
    %266 = vmatpush1.msra.mxu0 0.0
    %267 = vmatprep.subr.mxu0 0.0
    %268 = vmatpush1.msra.mxu0 0.0
    %269 = vmatprep.subr.mxu0 0.0
    %270 = vmatpush1.msra.mxu0 0.0
    %271 = vmatprep.subr.mxu0 0.0
    %272 = vmatpush1.msra.mxu0 0.0
    %273 = vmatprep.mubr.f32.mxu0 0.0
    %274 = vmatmul.mubr.f32.gmra.mrb[0].mxu0 %v207
    %v275 = vpop.f32.mrb[0].mxu0
    %v276 = vadd.f32 %v203, %v275
    %v277 = vpop.f32.mrb[0].mxu0
    %278 = vdwg.mxu0
    %279 = vst [vmem:[#allocation7] sm:$0x3] %v276
    // Predicated region
    $region18: #{tpu_custom_call.1} parent=1 // pred_check
      _
    $region19: #{tpu_custom_call.1} parent=1 // pred_check_branch
      %281 = sbr.rel (0) target = $region21
    $region20: #{tpu_custom_call.1} parent=1 // pred_region
      %s283 = ssub.s32 32, 32
      %284 = vsyncadd [#allocation4], %s283
      %s286 = sshll.u32 [#allocation7], 4
      %s287 = int_to_ptr.vmem [resolvable:$true] %s286
      %289 = dma.vmem_to_hbm [thread:$0]  %s287, 32, %s2, [#allocation4]
    $region21: #{tpu_custom_call.1} parent=1 // pred_fallthru
      _
    // Predicated region
    $region22: #{tpu_custom_call.1} parent=1 // pred_check
      _
    $region23: #{tpu_custom_call.1} parent=1 // pred_check_branch
      %291 = sbr.rel (0) target = $region25
    $region24: #{tpu_custom_call.1} parent=1 // pred_region
      %292 = dma.done [#allocation4], 32
    $region25: #{tpu_custom_call.1} parent=1 // pred_fallthru
      _
    %293 = vsyncpa [#allocation3], 1
    %294 = vsyncpa [#allocation6], 1
    %295 = vsyncpa [#allocation4], 1

</llo_original>
